<compile_context>
chip_gen: v6e
topology: v6e:2x2x1
jax: 0.10.0
libtpu: 0.0.40
codegen_flags: <defaults>
</compile_context>

<pallas_src>
import functools

import jax
import jax.numpy as jnp
from jax.experimental import pallas as pl
from jax.experimental.pallas import tpu as pltpu


# ---------------------------------------------------------------------------
# Kernel
# ---------------------------------------------------------------------------

def _rmsnorm_kernel(x_ref, w_ref, o_ref, *, eps, scale_in_input_dtype):
    # x_ref: (block_rows, hidden); w_ref: (1, hidden) in f32 or input dtype.
    x32 = x_ref[...].astype(jnp.float32)
    var = jnp.mean(x32 * x32, axis=-1, keepdims=True)
    inv = jax.lax.rsqrt(var + eps)
    if scale_in_input_dtype:
        # HF ordering for 16-bit inputs: downcast (x * inv) to the input
        # dtype, then multiply by the (16-bit) weight with packed VALU ops.
        y = (x32 * inv).astype(o_ref.dtype) * w_ref[...]
    else:
        y = (x32 * inv) * w_ref[...]
    o_ref[...] = y.astype(o_ref.dtype)


# ---------------------------------------------------------------------------
# Tiling helpers
# ---------------------------------------------------------------------------

def _cdiv(a: int, b: int) -> int:
    return -(-a // b)


def _align_up(v: int, a: int) -> int:
    return _cdiv(v, a) * a


def _row_alignment(dtype) -> int:
    """Rows per sublane-packed vreg for this dtype (8 / 16 / 32)."""
    itemsize = jnp.dtype(dtype).itemsize
    if itemsize >= 4:
        return 8
    if itemsize == 2:
        return 16
    return 32


def _physical_vmem_bytes() -> int:
    """Best-effort physical VMEM query; conservative (v7x) fallback."""
    try:
        info = pltpu.get_tpu_info()
        v = getattr(info, "vmem_capacity_bytes", None)
        if v:
            return int(v)
    except Exception:
        pass
    return 64 * 1024 * 1024


def _pick_block_rows(rows: int, hidden: int, dtype,
                     vmem_budget_bytes: int,
                     min_grid_steps: int = 4) -> int:
    """Largest aligned row block that fits the VMEM budget, including the
    in-kernel f32 temporaries, capped so the grid has >= min_grid_steps."""
    align = _row_alignment(dtype)
    dtype_bytes = jnp.dtype(dtype).itemsize
    # Per-row VMEM: 2x double-buffered input + output tiles in the input
    # dtype, plus ~2 row-widths of f32 temporaries inside the kernel body.
    per_row = 4 * hidden * dtype_bytes + 2 * hidden * 4
    br = (vmem_budget_bytes // max(per_row, 1) // align) * align
    br = max(align, br)
    # Keep at least a few grid steps so DMA/compute overlap and both v7x
    # TensorCores get work (per-step overhead is already amortized here).
    if rows > align * min_grid_steps:
        br = min(br, _align_up(_cdiv(rows, min_grid_steps), align))
    return min(br, rows)


# ---------------------------------------------------------------------------
# Wrapper
# ---------------------------------------------------------------------------

def rmsnorm(x: jax.Array, weight: jax.Array, eps: float = 1e-6,
            block_rows: int | None = None,
            vmem_budget_bytes: int = 16 * 1024 * 1024) -> jax.Array:
    """Apply RMSNorm over the last dim of x (any leading dims)."""
    orig_shape = x.shape
    hidden = orig_shape[-1]
    assert weight.shape == (hidden,), (weight.shape, hidden)

    x2d = x.reshape(-1, hidden)
    rows = x2d.shape[0]
    dtype_bytes = jnp.dtype(x.dtype).itemsize

    if block_rows is None:
        block_rows = _pick_block_rows(rows, hidden, x.dtype, vmem_budget_bytes)
    block_rows = max(1, min(block_rows, rows))

    # 16-bit inputs: do the final scale/weight multiplies in the input dtype
    # (HF ordering, packed VALU).  Otherwise keep the weight in f32.
    scale_in_input_dtype = dtype_bytes == 2
    w_dtype = x.dtype if scale_in_input_dtype else jnp.float32
    w2d = weight.astype(w_dtype).reshape(1, hidden)

    # VMEM limit: I/O double-buffers + f32 temporaries + weight, with
    # headroom, floored at 32 MiB and capped at ~90% of physical VMEM.
    io_bytes = 4 * block_rows * hidden * dtype_bytes
    tmp_bytes = 2 * block_rows * hidden * 4
    w_bytes = 2 * hidden * jnp.dtype(w_dtype).itemsize
    buf_bytes = io_bytes + tmp_bytes + w_bytes
    phys_vmem = _physical_vmem_bytes()
    vmem_limit = int(min(0.9 * phys_vmem,
                         max(32 * 1024 * 1024, buf_bytes * 1.3)))

    grid = (pl.cdiv(rows, block_rows),)

    out = pl.pallas_call(
        functools.partial(_rmsnorm_kernel, eps=eps,
                          scale_in_input_dtype=scale_in_input_dtype),
        out_shape=jax.ShapeDtypeStruct((rows, hidden), x.dtype),
        grid_spec=pltpu.PrefetchScalarGridSpec(
            num_scalar_prefetch=0,
            grid=grid,
            in_specs=[
                pl.BlockSpec((block_rows, hidden), lambda i: (i, 0)),
                pl.BlockSpec((1, hidden), lambda i: (0, 0)),
            ],
            out_specs=pl.BlockSpec((block_rows, hidden), lambda i: (i, 0)),
        ),
        compiler_params=pltpu.CompilerParams(
            dimension_semantics=("parallel",),
            vmem_limit_bytes=vmem_limit,
        ),
    )(x2d, w2d)

    return out.reshape(orig_shape)


class RMSNormPallas:
    """Mirror of ipex.llm.modules.RMSNorm with a Pallas forward."""

    def __init__(self, hidden_size: int, eps: float = 1e-6, weight=None):
        self.eps = eps
        # Module default: ones(hidden_size).
        self.weight = (weight if weight is not None
                       else jnp.ones((hidden_size,), dtype=jnp.float32))
        self._w_cache = {}  # per-compute-dtype cached casts of the weight

    def _weight_for(self, x_dtype):
        key = jnp.dtype(x_dtype).name
        w = self._w_cache.get(key)
        if w is None:
            target = x_dtype if jnp.dtype(x_dtype).itemsize == 2 else jnp.float32
            w = self.weight.astype(target)
            self._w_cache[key] = w
        return w

    def __call__(self, x):
        return rmsnorm(x, self._weight_for(x.dtype), self.eps)

    @classmethod
    def apply_function(cls, hidden_states, weight, eps):
        return rmsnorm(hidden_states, weight, eps)


# ---------------------------------------------------------------------------
# Reference + smoke test
# ---------------------------------------------------------------------------

def _ref_rmsnorm(x, weight, eps):
    xf = x.astype(jnp.float32)
    var = jnp.mean(xf * xf, axis=-1, keepdims=True)
    y32 = xf * jax.lax.rsqrt(var + eps)
    if jnp.dtype(x.dtype).itemsize == 2:
        return (y32.astype(x.dtype) * weight.astype(x.dtype)).astype(x.dtype)
    return (y32 * weight.astype(jnp.float32)).astype(x.dtype)


if __name__ == "__main__":
    key = jax.random.PRNGKey(0)
    batch, seq, hidden = 2, 8, 32
    x = jax.random.normal(key, (batch, seq, hidden), dtype=jnp.float32)

    # Non-trivial weight for a stronger check (module default would be ones).
    wkey = jax.random.fold_in(key, 1)
    weight = 1.0 + 0.1 * jax.random.normal(wkey, (hidden,), dtype=jnp.float32)

    module = RMSNormPallas(hidden, eps=1e-6, weight=weight)
    out = module(x)
    jax.block_until_ready(out)

    ref = _ref_rmsnorm(x, weight, 1e-6)
    assert out.shape == x.shape and out.dtype == x.dtype
    assert jnp.allclose(out, ref, atol=1e-5, rtol=1e-5)

    # Ragged-last-block path (rows not divisible by block_rows) with an
    # explicit non-default block size, still at small shapes.
    x2 = jax.random.normal(jax.random.fold_in(key, 2), (3, 7, hidden),
                           dtype=jnp.float32)
    out2 = rmsnorm(x2, weight, 1e-6, block_rows=8)
    jax.block_until_ready(out2)
    assert jnp.allclose(out2, _ref_rmsnorm(x2, weight, 1e-6),
                        atol=1e-5, rtol=1e-5)

    # 16-bit path (packed-dtype scale/weight multiply, HF ordering).
    x3 = jax.random.normal(jax.random.fold_in(key, 3), (batch, seq, hidden),
                           dtype=jnp.bfloat16)
    out3 = module(x3)
    jax.block_until_ready(out3)
    ref3 = _ref_rmsnorm(x3, weight, 1e-6)
    assert out3.dtype == jnp.bfloat16
    assert jnp.allclose(out3.astype(jnp.float32), ref3.astype(jnp.float32),
                        atol=2e-2, rtol=2e-2)

    print("KERNEL_OK")
</pallas_src>

<mosaic_0001>
module attributes {stable_mosaic.version = 11 : i64} {
  func.func @_rmsnorm_kernel(%arg0: i32, %arg1: memref<16x32xf32, #tpu.memory_space<vmem>>, %arg2: memref<1x32xf32, #tpu.memory_space<vmem>>, %arg3: memref<16x32xf32, #tpu.memory_space<vmem>>) attributes {dimension_semantics = [#tpu.dimension_semantics<parallel>], iteration_bounds = array<i64: 1>, scalar_prefetch = 0 : i64, scratch_operands = 0 : i64, tpu.core_type = #tpu.core_type<tc>, window_params = [{transform_indices = @transform_0, window_bounds = array<i64: 16, 32>}, {pipeline_mode = #tpu.pipeline_mode<synchronous>, transform_indices = @transform_1, window_bounds = array<i64: 1, 32>}, {transform_indices = @transform_2, window_bounds = array<i64: 16, 32>}]} {
    %c0 = arith.constant 0 : index
    %c0_0 = arith.constant 0 : index
    %0 = vector.load %arg1[%c0, %c0_0] : memref<16x32xf32, #tpu.memory_space<vmem>>, vector<16x32xf32>
    %1 = arith.mulf %0, %0 : vector<16x32xf32>
    %cst = arith.constant dense<0.000000e+00> : vector<16xf32>
    %2 = vector.multi_reduction <add>, %1, %cst [1] : vector<16x32xf32> to vector<16xf32>
    %3 = vector.shape_cast %2 : vector<16xf32> to vector<16x1xf32>
    %cst_1 = arith.constant 3.200000e+01 : f32
    %4 = vector.broadcast %cst_1 : f32 to vector<16x1xf32>
    %5 = arith.divf %3, %4 : vector<16x1xf32>
    %cst_2 = arith.constant 9.99999997E-7 : f32
    %6 = vector.broadcast %cst_2 : f32 to vector<16x1xf32>
    %7 = arith.addf %5, %6 : vector<16x1xf32>
    %8 = math.rsqrt %7 : vector<16x1xf32>
    %9 = vector.broadcast %8 : vector<16x1xf32> to vector<16x32xf32>
    %10 = arith.mulf %0, %9 : vector<16x32xf32>
    %c0_3 = arith.constant 0 : index
    %c0_4 = arith.constant 0 : index
    %11 = vector.load %arg2[%c0_3, %c0_4] : memref<1x32xf32, #tpu.memory_space<vmem>>, vector<1x32xf32>
    %12 = vector.broadcast %11 : vector<1x32xf32> to vector<16x32xf32>
    %13 = arith.mulf %10, %12 : vector<16x32xf32>
    %c0_5 = arith.constant 0 : index
    %c0_6 = arith.constant 0 : index
    %14 = vector.load %arg3[%c0_5, %c0_6] : memref<16x32xf32, #tpu.memory_space<vmem>>, vector<16x32xf32>
    tpu.vector_store %arg3[%c0_5, %c0_6], %13 {strides = array<i32>} : memref<16x32xf32, #tpu.memory_space<vmem>>, vector<16x32xf32>,
    return
  }
  func.func @transform_0(%arg0: i32) -> (i32, i32) {
    %c0_i32 = arith.constant 0 : i32
    %c0_i32_0 = arith.constant 0 : i32
    return %arg0, %c0_i32 : i32, i32
  }
  func.func @transform_1(%arg0: i32) -> (i32, i32) {
    %c0_i32 = arith.constant 0 : i32
    %c0_i32_0 = arith.constant 0 : i32
    %c0_i32_1 = arith.constant 0 : i32
    return %c0_i32, %c0_i32_0 : i32, i32
  }
  func.func @transform_2(%arg0: i32) -> (i32, i32) {
    %c0_i32 = arith.constant 0 : i32
    %c0_i32_0 = arith.constant 0 : i32
    return %arg0, %c0_i32 : i32, i32
  }
}

</mosaic_0001>

<llo_original>
// kernel: tpu_custom_call.1
$region0: #{tpu_custom_call.1}
  #allocation0 [shape = 'u32[]', space=smem, size = 0x4, offset = 0x4, fixed_abs, tag = 'smem constant byte address 0x4 - core index']
  #allocation1 [shape = 'u32[144,128]{1,0:T(1,128)}', space=vmem, size = 0x12000, scoped, tag = 'internal scratch']
  %s0 = inlined_call_operand.hbm [shape: f32[16,32], index: 0, kind: input, shape index: {}]
  %s1 = inlined_call_operand.vmem [shape: f32[1,32], index: 1, kind: input, shape index: {}]
  %s2 = inlined_call_operand.hbm [shape: f32[16,32], index: 2, kind: output, shape index: {}]
  %s3 = sld [smem:[#allocation0]]
  $region22: #{tpu_custom_call.1} parent=0
    _
  %s5 = ssub.s32 1, %s3
  %s6 = scalar_select 0, %s5, %s3
  $region1: #{tpu_custom_call.1} parent=0
    #allocation2 [shape = 'u8[8192]{0}', space=vmem, size = 0x2000, scoped, tag = 'input window, operand 0, single buffered']
    #allocation3 [shape = 's32[1]{0}', space=sflag, size = 0x4, scoped, tag = 'scoped memory for tpu_custom_call.1']
    #allocation4 [shape = 's32[1]{0}', space=sflag, size = 0x4, scoped, tag = 'scoped memory for tpu_custom_call.1']
    #allocation5 [shape = 'u8[8192]{0}', space=vmem, size = 0x2000, scoped, tag = 'output window, operand 0, single buffered']
    %7 = vsyncpa [#allocation3], 0
    %8 = vsyncpa [#allocation4], 0
    // Predicated region
    $region2: #{tpu_custom_call.1} parent=1 // pred_check
      _
    $region3: #{tpu_custom_call.1} parent=1 // pred_check_branch
      %10 = sbr.rel (0) target = $region5
    $region4: #{tpu_custom_call.1} parent=1 // pred_region
      %s12 = ssub.s32 256, 256
      %13 = vsyncadd [#allocation3], %s12
      %s14 = sshll.u32 [#allocation2], 4
      %s15 = int_to_ptr.vmem [resolvable:$true] %s14
      %20 = dma.hbm_to_vmem [thread:$0]  %s0, 256, %s15, [#allocation3], 128, 128, 8
    $region5: #{tpu_custom_call.1} parent=1 // pred_fallthru
      _
    // Predicated region
    $region6: #{tpu_custom_call.1} parent=1 // pred_check
      _
    $region7: #{tpu_custom_call.1} parent=1 // pred_check_branch
      %22 = sbr.rel (0) target = $region9
    $region8: #{tpu_custom_call.1} parent=1 // pred_region
      _
    $region9: #{tpu_custom_call.1} parent=1 // pred_fallthru
      _
    // Predicated region
    $region10: #{tpu_custom_call.1} parent=1 // pred_check
      _
    $region11: #{tpu_custom_call.1} parent=1 // pred_check_branch
      %24 = sbr.rel (0) target = $region13
    $region12: #{tpu_custom_call.1} parent=1 // pred_region
      %25 = dma.done [#allocation3], 256
    $region13: #{tpu_custom_call.1} parent=1 // pred_fallthru
      _
    %v26 = vld [vmem:[#allocation2] sm:$0xff]
    %v27 = vld [vmem:[#allocation2 + $0x8] sm:$0xff]
    %v28 = vmul.f32 %v26, %v26
    %v29 = vmul.f32 %v27, %v27
    %vm30 = vcmask 261120
    %v31 = vsel %vm30, %v28, 0.0
    %32 = vadd.xlane.f32.xlu0 %v31
    %v33 = vpop.xlane.xlu0 %32
    %v34 = vsel %vm30, %v29, 0.0
    %35 = vadd.xlane.f32.xlu0 %v34
    %v36 = vpop.xlane.xlu0 %35
    %v37 = vrcp.pop 32.0
    %v38 = vmul.f32 %v33, %v37
    %v39 = vmul.f32 %v36, %v37
    %v40 = vadd.f32 %v38, 1e-06
    %v41 = vadd.f32 %v39, 1e-06
    %v42 = vrsqrt.pop %v40
    %v43 = vrsqrt.pop %v41
    %v44 = vmul.f32 %v26, %v42
    %v45 = vmul.f32 %v27, %v43
    %v46 = vld [vmem:[%s1] sm:$0x1]
    %v48 = vlaneseq
    %v49 = vshrl.u32 %v48, 7
    %v50 = vsub.s32 0, %v49
    %v51 = vrot.slane %v46, %v50
    %v53 = vmul.f32 %v44, %v51
    %v54 = vmul.f32 %v45, %v51
    %55 = vst.msk [vmem:[#allocation5] sm:$0xff] %vm30, %v53
    %56 = vst.msk [vmem:[#allocation5 + $0x8] sm:$0xff] %vm30, %v54
    // Predicated region
    $region14: #{tpu_custom_call.1} parent=1 // pred_check
      _
    $region15: #{tpu_custom_call.1} parent=1 // pred_check_branch
      %58 = sbr.rel (0) target = $region17
    $region16: #{tpu_custom_call.1} parent=1 // pred_region
      %s60 = ssub.s32 256, 256
      %61 = vsyncadd [#allocation4], %s60
      %s62 = sshll.u32 [#allocation5], 4
      %s63 = int_to_ptr.vmem [resolvable:$true] %s62
      %68 = dma.vmem_to_hbm [thread:$0]  %s63, 256, %s2, [#allocation4], 128, 128, 8
    $region17: #{tpu_custom_call.1} parent=1 // pred_fallthru
      _
    // Predicated region
    $region18: #{tpu_custom_call.1} parent=1 // pred_check
      _
    $region19: #{tpu_custom_call.1} parent=1 // pred_check_branch
      %70 = sbr.rel (0) target = $region21
    $region20: #{tpu_custom_call.1} parent=1 // pred_region
      %71 = dma.done [#allocation4], 256
    $region21: #{tpu_custom_call.1} parent=1 // pred_fallthru
      _
    %72 = vsyncpa [#allocation3], 1
    %73 = vsyncpa [#allocation4], 1

</llo_original>
